<compile_context>
chip_gen: v7x
topology: tpu7x:2x2x1
jax: 0.10.0
libtpu: 0.0.40
codegen_flags: <defaults>
</compile_context>

<pallas_src>
import jax
import jax.numpy as jnp
from jax.experimental import pallas as pl
from jax.experimental.pallas import tpu as pltpu


def _round_up(a, b):
    return (a + b - 1) // b * b


def _conv_bn_relu_kernel(w_ref, x_ref, scale_ref, shift_ref, o_ref):
    # w_ref:     (TH, CKp)  im2col conv weights (MXU operand dtype)
    # x_ref:     (CKp, TM)  im2col input patches (MXU operand dtype)
    # scale_ref: (TH, 1)    folded BN scale, f32
    # shift_ref: (TH, 1)    folded conv-bias + BN shift, f32
    # o_ref:     (TH, TM)   f32 output slab (lane-dense last dim)
    acc = jnp.dot(w_ref[...], x_ref[...], preferred_element_type=jnp.float32)
    y = acc * scale_ref[...] + shift_ref[...]   # fused conv bias + BatchNorm (eval)
    y = jnp.maximum(y, 0.0)                     # ReLU
    # Dropout: eval mode -> identity.
    o_ref[...] = y.astype(o_ref.dtype)


def conv1d_bn_relu_dropout(x, weight, bias, gamma, beta, running_mean,
                           running_var, eps=1e-5, compute_dtype=jnp.bfloat16):
    """x: (N, C, L) f32. weight: (H, C, K). Returns (N, H, L) f32 (eval-mode fwd)."""
    N, C, L = x.shape
    H, _, K = weight.shape
    pad = K // 2
    CK = C * K
    M = N * L                          # batch folded into the lane (last) dim

    # ---- Fold conv bias + BatchNorm(eval, running stats, affine) into scale/shift.
    scale = (gamma / jnp.sqrt(running_var + eps)).astype(jnp.float32)     # (H,)
    shift = ((bias - running_mean) * scale + beta).astype(jnp.float32)    # (H,)

    # ---- im2col in the wrapper (cheap XLA data movement, keeps kernel MXU-dense):
    # x_col[c*K + k, n*L + l] = x_pad[n, c, l + k]
    x_pad = jnp.pad(x, ((0, 0), (0, 0), (pad, pad)))                      # (N, C, Lp)
    patches = jnp.stack([x_pad[:, :, k:k + L] for k in range(K)], axis=0)  # (K,N,C,L)
    x_col = jnp.transpose(patches, (2, 0, 1, 3)).reshape(CK, M)
    w_col = weight.reshape(H, CK)      # matches c*K + k row-major flattening

    # ---- Pad to TPU-friendly shapes: lane-dense last dim, sublane-aligned rows.
    LANE, SUB = 128, 8
    CKp = _round_up(CK, SUB)
    Hp = _round_up(H, SUB)
    Mp = _round_up(M, LANE)
    # Whole problem per step when small (grid collapses to (1,1)); bounded tiles
    # when scaled up.  Tiles sized conservatively for v7x's 64 MiB VMEM.
    TH = Hp if Hp <= 256 else 256
    TM = Mp if Mp <= 512 else 512
    Hp = _round_up(Hp, TH)
    Mp = _round_up(Mp, TM)

    w_p = jnp.zeros((Hp, CKp), compute_dtype).at[:H, :CK].set(
        w_col.astype(compute_dtype))
    x_p = jnp.zeros((CKp, Mp), compute_dtype).at[:CK, :M].set(
        x_col.astype(compute_dtype))
    scale_p = jnp.zeros((Hp, 1), jnp.float32).at[:H, 0].set(scale)
    shift_p = jnp.zeros((Hp, 1), jnp.float32).at[:H, 0].set(shift)

    out = pl.pallas_call(
        _conv_bn_relu_kernel,
        out_shape=jax.ShapeDtypeStruct((Hp, Mp), jnp.float32),
        grid_spec=pltpu.PrefetchScalarGridSpec(
            num_scalar_prefetch=0,
            grid=(Hp // TH, Mp // TM),
            in_specs=[
                pl.BlockSpec((TH, CKp), lambda h, m: (h, 0)),
                pl.BlockSpec((CKp, TM), lambda h, m: (0, m)),
                pl.BlockSpec((TH, 1), lambda h, m: (h, 0)),
                pl.BlockSpec((TH, 1), lambda h, m: (h, 0)),
            ],
            out_specs=pl.BlockSpec((TH, TM), lambda h, m: (h, m)),
        ),
        compiler_params=pltpu.CompilerParams(
            dimension_semantics=("parallel", "parallel"),
        ),
    )(w_p, x_p, scale_p, shift_p)

    # ---- Undo padding and restore PyTorch (N, H, L) layout.
    y = out[:H, :M].reshape(H, N, L)
    return jnp.transpose(y, (1, 0, 2)).astype(x.dtype)


def reference(x, weight, bias, gamma, beta, running_mean, running_var, eps=1e-5):
    N, C, L = x.shape
    H, _, K = weight.shape
    pad = K // 2
    x_pad = jnp.pad(x, ((0, 0), (0, 0), (pad, pad)))
    patches = jnp.stack([x_pad[:, :, k:k + L] for k in range(K)], axis=2)  # (N,C,K,L)
    conv = jnp.einsum("nckl,hck->nhl", patches, weight) + bias[None, :, None]
    bn = (conv - running_mean[None, :, None]) / jnp.sqrt(
        running_var[None, :, None] + eps) * gamma[None, :, None] + beta[None, :, None]
    return jnp.maximum(bn, 0.0)


if __name__ == "__main__":
    # Module hyperparameters (small, consistent with Conv1D_BatchNorm_Relu_Dropout)
    N, C, L = 2, 4, 16          # batch, input_dim, sequence length
    H, K = 32, 5                # hidden_dims, kernel_size

    key = jax.random.PRNGKey(0)
    kx, kw, kb, kg, kbe, km, kv = jax.random.split(key, 7)

    x = jax.random.normal(kx, (N, C, L), dtype=jnp.float32)
    weight = jax.random.normal(kw, (H, C, K), dtype=jnp.float32) * 0.1
    bias = jax.random.normal(kb, (H,), dtype=jnp.float32) * 0.1
    gamma = jax.random.uniform(kg, (H,), minval=0.5, maxval=1.5, dtype=jnp.float32)
    beta = jax.random.normal(kbe, (H,), dtype=jnp.float32) * 0.1
    running_mean = jax.random.normal(km, (H,), dtype=jnp.float32) * 0.1
    running_var = jax.random.uniform(kv, (H,), minval=0.5, maxval=1.5,
                                     dtype=jnp.float32)

    ref = reference(x, weight, bias, gamma, beta, running_mean, running_var)

    # 1) f32 MXU operands: tight check against the f32 reference.
    out_f32 = conv1d_bn_relu_dropout(x, weight, bias, gamma, beta,
                                     running_mean, running_var,
                                     compute_dtype=jnp.float32)
    out_f32 = jax.block_until_ready(out_f32)
    assert out_f32.shape == (N, H, L)
    assert jnp.allclose(out_f32, ref, atol=1e-4, rtol=1e-4), "f32 mismatch vs ref"

    # 2) bf16 MXU operands (default; MXU-native on v6e/v7x): loosened tolerance.
    out_bf16 = conv1d_bn_relu_dropout(x, weight, bias, gamma, beta,
                                      running_mean, running_var)
    out_bf16 = jax.block_until_ready(out_bf16)
    assert out_bf16.shape == (N, H, L)
    assert jnp.allclose(out_bf16, ref, atol=1e-1, rtol=1e-1), "bf16 mismatch vs ref"

    print("KERNEL_OK")
</pallas_src>

<mosaic_0001>
module attributes {stable_mosaic.version = 11 : i64} {
  func.func @_conv_bn_relu_kernel(%arg0: i32, %arg1: i32, %arg2: memref<32x24xf32, #tpu.memory_space<vmem>>, %arg3: memref<24x128xf32, #tpu.memory_space<vmem>>, %arg4: memref<32x1xf32, #tpu.memory_space<vmem>>, %arg5: memref<32x1xf32, #tpu.memory_space<vmem>>, %arg6: memref<32x128xf32, #tpu.memory_space<vmem>>) attributes {dimension_semantics = [#tpu.dimension_semantics<parallel>, #tpu.dimension_semantics<parallel>], iteration_bounds = array<i64: 1, 1>, scalar_prefetch = 0 : i64, scratch_operands = 0 : i64, tpu.core_type = #tpu.core_type<tc>, window_params = [{transform_indices = @transform_0, window_bounds = array<i64: 32, 24>}, {transform_indices = @transform_1, window_bounds = array<i64: 24, 128>}, {transform_indices = @transform_2, window_bounds = array<i64: 32, 1>}, {transform_indices = @transform_3, window_bounds = array<i64: 32, 1>}, {transform_indices = @transform_4, window_bounds = array<i64: 32, 128>}]} {
    %c0 = arith.constant 0 : index
    %c0_0 = arith.constant 0 : index
    %0 = vector.load %arg2[%c0, %c0_0] : memref<32x24xf32, #tpu.memory_space<vmem>>, vector<32x24xf32>
    %c0_1 = arith.constant 0 : index
    %c0_2 = arith.constant 0 : index
    %1 = vector.load %arg3[%c0_1, %c0_2] : memref<24x128xf32, #tpu.memory_space<vmem>>, vector<24x128xf32>
    %cst = arith.constant dense<0.000000e+00> : vector<32x128xf32>
    %2 = tpu.matmul %0, %1, %cst {dimension_numbers = #tpu.dot_dimension_numbers<[1], [0], [0], [1], [0, 0, 1, 1], [], []>} : vector<32x24xf32>, vector<24x128xf32>, vector<32x128xf32> -> vector<32x128xf32>
    %c0_3 = arith.constant 0 : index
    %c0_4 = arith.constant 0 : index
    %3 = vector.load %arg4[%c0_3, %c0_4] : memref<32x1xf32, #tpu.memory_space<vmem>>, vector<32x1xf32>
    %4 = vector.broadcast %3 : vector<32x1xf32> to vector<32x128xf32>
    %5 = arith.mulf %2, %4 : vector<32x128xf32>
    %c0_5 = arith.constant 0 : index
    %c0_6 = arith.constant 0 : index
    %6 = vector.load %arg5[%c0_5, %c0_6] : memref<32x1xf32, #tpu.memory_space<vmem>>, vector<32x1xf32>
    %7 = vector.broadcast %6 : vector<32x1xf32> to vector<32x128xf32>
    %8 = arith.addf %5, %7 : vector<32x128xf32>
    %cst_7 = arith.constant 0.000000e+00 : f32
    %9 = vector.broadcast %cst_7 : f32 to vector<32x128xf32>
    %10 = arith.maximumf %8, %9 : vector<32x128xf32>
    %c0_8 = arith.constant 0 : index
    %c0_9 = arith.constant 0 : index
    %11 = vector.load %arg6[%c0_8, %c0_9] : memref<32x128xf32, #tpu.memory_space<vmem>>, vector<32x128xf32>
    tpu.vector_store %arg6[%c0_8, %c0_9], %10 {strides = array<i32>} : memref<32x128xf32, #tpu.memory_space<vmem>>, vector<32x128xf32>,
    return
  }
  func.func @transform_0(%arg0: i32, %arg1: i32) -> (i32, i32) {
    %c0_i32 = arith.constant 0 : i32
    %c0_i32_0 = arith.constant 0 : i32
    return %arg0, %c0_i32 : i32, i32
  }
  func.func @transform_1(%arg0: i32, %arg1: i32) -> (i32, i32) {
    %c0_i32 = arith.constant 0 : i32
    %c0_i32_0 = arith.constant 0 : i32
    return %c0_i32, %arg1 : i32, i32
  }
  func.func @transform_2(%arg0: i32, %arg1: i32) -> (i32, i32) {
    %c0_i32 = arith.constant 0 : i32
    %c0_i32_0 = arith.constant 0 : i32
    return %arg0, %c0_i32 : i32, i32
  }
  func.func @transform_3(%arg0: i32, %arg1: i32) -> (i32, i32) {
    %c0_i32 = arith.constant 0 : i32
    %c0_i32_0 = arith.constant 0 : i32
    return %arg0, %c0_i32 : i32, i32
  }
  func.func @transform_4(%arg0: i32, %arg1: i32) -> (i32, i32) {
    %c0_i32 = arith.constant 0 : i32
    return %arg0, %arg1 : i32, i32
  }
}

</mosaic_0001>

<llo_original>
// kernel: tpu_custom_call.1
$region0: #{tpu_custom_call.1}
  #allocation0 [shape = 'u32[]', space=smem, size = 0x4, offset = 0x4, fixed_abs, tag = 'smem constant byte address 0x4 - core index']
  #allocation1 [shape = 'u32[144,128]{1,0:T(1,128)}', space=vmem, size = 0x12000, scoped, tag = 'internal scratch']
  %s0 = inlined_call_operand.vmem [shape: f32[32,24], index: 0, kind: input, shape index: {}]
  %s1 = inlined_call_operand.vmem [shape: f32[24,128], index: 1, kind: input, shape index: {}]
  %s2 = inlined_call_operand.vmem [shape: f32[32,1], index: 2, kind: input, shape index: {}]
  %s3 = inlined_call_operand.vmem [shape: f32[32,1], index: 3, kind: input, shape index: {}]
  %s4 = inlined_call_operand.hbm [shape: f32[32,128], index: 4, kind: output, shape index: {}]
  %s5 = sld [smem:[#allocation0]]
  $region26: #{tpu_custom_call.1} parent=0
    _
  %s7 = ssub.s32 1, %s5
  %s8 = scalar_select 0, %s7, %s5
  $region1: #{tpu_custom_call.1} parent=0
    #allocation2 [shape = 'u8[16384]{0}', space=vmem, size = 0x4000, scoped, tag = 'output window, operand 0, single buffered']
    #allocation3 [shape = 's32[1]{0}', space=sflag, size = 0x4, scoped, tag = 'scoped memory for tpu_custom_call.1']
    %9 = vsyncpa [#allocation3], 0
    // Predicated region
    $region2: #{tpu_custom_call.1} parent=1 // pred_check
      _
    $region3: #{tpu_custom_call.1} parent=1 // pred_check_branch
      %11 = sbr.rel (0) target = $region5
    $region4: #{tpu_custom_call.1} parent=1 // pred_region
      _
    $region5: #{tpu_custom_call.1} parent=1 // pred_fallthru
      _
    // Predicated region
    $region6: #{tpu_custom_call.1} parent=1 // pred_check
      _
    $region7: #{tpu_custom_call.1} parent=1 // pred_check_branch
      %13 = sbr.rel (0) target = $region9
    $region8: #{tpu_custom_call.1} parent=1 // pred_region
      _
    $region9: #{tpu_custom_call.1} parent=1 // pred_fallthru
      _
    // Predicated region
    $region10: #{tpu_custom_call.1} parent=1 // pred_check
      _
    $region11: #{tpu_custom_call.1} parent=1 // pred_check_branch
      %15 = sbr.rel (0) target = $region13
    $region12: #{tpu_custom_call.1} parent=1 // pred_region
      _
    $region13: #{tpu_custom_call.1} parent=1 // pred_fallthru
      _
    // Predicated region
    $region14: #{tpu_custom_call.1} parent=1 // pred_check
      _
    $region15: #{tpu_custom_call.1} parent=1 // pred_check_branch
      %17 = sbr.rel (0) target = $region17
    $region16: #{tpu_custom_call.1} parent=1 // pred_region
      _
    $region17: #{tpu_custom_call.1} parent=1 // pred_fallthru
      _
    %v18 = vld [vmem:[%s0] sm:$0xff]
    %v19 = vld [vmem:[%s0 + $0x8] sm:$0xff]
    %v20 = vld [vmem:[%s0 + $0x10] sm:$0xff]
    %v21 = vld [vmem:[%s0 + $0x18] sm:$0xff]
    %v22 = vld [vmem:[%s1] sm:$0xff]
    %v23 = vld [vmem:[%s1 + $0x8] sm:$0xff]
    %v24 = vld [vmem:[%s1 + $0x10] sm:$0xff]
    %vm25 = vcmask 195584
    %v27 = vsel %vm25, %v18, 0
    %v30 = vsel %vm25, %v19, 0
    %v33 = vsel %vm25, %v20, 0
    %v36 = vsel %vm25, %v21, 0
    %38 = vmatprep.subr.mxu0 0.0
    %39 = vmatpush1.msra.mxu0 %v22
    %40 = vmatprep.subr.mxu0 0.0
    %41 = vmatpush1.msra.mxu0 %v23
    %42 = vmatprep.subr.mxu0 0.0
    %43 = vmatpush1.msra.mxu0 %v24
    %44 = vmatprep.subr.mxu0 0.0
    %45 = vmatpush1.msra.mxu0 0.0
    %46 = vmatprep.subr.mxu0 0.0
    %47 = vmatpush1.msra.mxu0 0.0
    %48 = vmatprep.subr.mxu0 0.0
    %49 = vmatpush1.msra.mxu0 0.0
    %50 = vmatprep.subr.mxu0 0.0
    %51 = vmatpush1.msra.mxu0 0.0
    %52 = vmatprep.subr.mxu0 0.0
    %53 = vmatpush1.msra.mxu0 0.0
    %54 = vmatprep.subr.mxu0 0.0
    %55 = vmatpush1.msra.mxu0 0.0
    %56 = vmatprep.subr.mxu0 0.0
    %57 = vmatpush1.msra.mxu0 0.0
    %58 = vmatprep.subr.mxu0 0.0
    %59 = vmatpush1.msra.mxu0 0.0
    %60 = vmatprep.subr.mxu0 0.0
    %61 = vmatpush1.msra.mxu0 0.0
    %62 = vmatprep.subr.mxu0 0.0
    %63 = vmatpush1.msra.mxu0 0.0
    %64 = vmatprep.subr.mxu0 0.0
    %65 = vmatpush1.msra.mxu0 0.0
    %66 = vmatprep.subr.mxu0 0.0
    %67 = vmatpush1.msra.mxu0 0.0
    %68 = vmatprep.subr.mxu0 0.0
    %69 = vmatpush1.msra.mxu0 0.0
    %70 = vmatprep.subr.mxu0 0.0
    %71 = vmatpush1.msra.mxu0 0.0
    %72 = vmatprep.subr.mxu0 0.0
    %73 = vmatpush1.msra.mxu0 0.0
    %74 = vmatprep.subr.mxu0 0.0
    %75 = vmatpush1.msra.mxu0 0.0
    %76 = vmatprep.subr.mxu0 0.0
    %77 = vmatpush1.msra.mxu0 0.0
    %78 = vmatprep.subr.mxu0 0.0
    %79 = vmatpush1.msra.mxu0 0.0
    %80 = vmatprep.subr.mxu0 0.0
    %81 = vmatpush1.msra.mxu0 0.0
    %82 = vmatprep.subr.mxu0 0.0
    %83 = vmatpush1.msra.mxu0 0.0
    %84 = vmatprep.subr.mxu0 0.0
    %85 = vmatpush1.msra.mxu0 0.0
    %86 = vmatprep.subr.mxu0 0.0
    %87 = vmatpush1.msra.mxu0 0.0
    %88 = vmatprep.subr.mxu0 0.0
    %89 = vmatpush1.msra.mxu0 0.0
    %90 = vmatprep.subr.mxu0 0.0
    %91 = vmatpush1.msra.mxu0 0.0
    %92 = vmatprep.subr.mxu0 0.0
    %93 = vmatpush1.msra.mxu0 0.0
    %94 = vmatprep.subr.mxu0 0.0
    %95 = vmatpush1.msra.mxu0 0.0
    %96 = vmatprep.subr.mxu0 0.0
    %97 = vmatpush1.msra.mxu0 0.0
    %98 = vmatprep.subr.mxu0 0.0
    %99 = vmatpush1.msra.mxu0 0.0
    %100 = vmatprep.subr.mxu0 0.0
    %101 = vmatpush1.msra.mxu0 0.0
    %102 = vmatprep.mubr.f32.mxu0 0.0
    %103 = vmatmul.mubr.f32.gmra.mrb[0].mxu0 %v27
    %v104 = vpop.f32.mrb[0].mxu0
    %v105 = vadd.f32 0.0, %v104
    %v106 = vpop.f32.mrb[0].mxu0
    %107 = vmatprep.mubr.f32.mxu0 0.0
    %108 = vmatmul.mubr.f32.gmra.mrb[0].mxu0 %v30
    %v109 = vpop.f32.mrb[0].mxu0
    %v110 = vadd.f32 0.0, %v109
    %v111 = vpop.f32.mrb[0].mxu0
    %112 = vmatprep.mubr.f32.mxu0 0.0
    %113 = vmatmul.mubr.f32.gmra.mrb[0].mxu0 %v33
    %v114 = vpop.f32.mrb[0].mxu0
    %v115 = vadd.f32 0.0, %v114
    %v116 = vpop.f32.mrb[0].mxu0
    %117 = vmatprep.mubr.f32.mxu0 0.0
    %118 = vmatmul.mubr.f32.gmra.mrb[0].mxu0 %v36
    %v119 = vpop.f32.mrb[0].mxu0
    %v120 = vadd.f32 0.0, %v119
    %v121 = vpop.f32.mrb[0].mxu0
    %122 = vdwg.mxu0
    %v123 = vld [vmem:[%s2] sm:$0xff]
    %v124 = vld [vmem:[%s2 + $0x8] sm:$0xff]
    %v125 = vld [vmem:[%s2 + $0x10] sm:$0xff]
    %v126 = vld [vmem:[%s2 + $0x18] sm:$0xff]
    %128 = vset.pattern.permute.xlu0 0
    %129 = vperm.xlu0 %128, %v123
    %v130 = vpop.permute.xlu0 %129
    %133 = vset.pattern.permute.xlu0 0
    %134 = vperm.xlu0 %133, %v124
    %v135 = vpop.permute.xlu0 %134
    %138 = vset.pattern.permute.xlu0 0
    %139 = vperm.xlu0 %138, %v125
    %v140 = vpop.permute.xlu0 %139
    %143 = vset.pattern.permute.xlu0 0
    %144 = vperm.xlu0 %143, %v126
    %v145 = vpop.permute.xlu0 %144
    %v147 = vmul.f32 %v105, %v130
    %v148 = vmul.f32 %v110, %v135
    %v149 = vmul.f32 %v115, %v140
    %v150 = vmul.f32 %v120, %v145
    %v151 = vld [vmem:[%s3] sm:$0xff]
    %v152 = vld [vmem:[%s3 + $0x8] sm:$0xff]
    %v153 = vld [vmem:[%s3 + $0x10] sm:$0xff]
    %v154 = vld [vmem:[%s3 + $0x18] sm:$0xff]
    %156 = vset.pattern.permute.xlu0 0
    %157 = vperm.xlu0 %156, %v151
    %v158 = vpop.permute.xlu0 %157
    %161 = vset.pattern.permute.xlu0 0
    %162 = vperm.xlu0 %161, %v152
    %v163 = vpop.permute.xlu0 %162
    %166 = vset.pattern.permute.xlu0 0
    %167 = vperm.xlu0 %166, %v153
    %v168 = vpop.permute.xlu0 %167
    %171 = vset.pattern.permute.xlu0 0
    %172 = vperm.xlu0 %171, %v154
    %v173 = vpop.permute.xlu0 %172
    %v175 = vadd.f32 %v147, %v158
    %v176 = vadd.f32 %v148, %v163
    %v177 = vadd.f32 %v149, %v168
    %v178 = vadd.f32 %v150, %v173
    %v179 = vmax.f32 %v175, 0.0
    %v180 = vmax.f32 %v176, 0.0
    %v181 = vmax.f32 %v177, 0.0
    %v182 = vmax.f32 %v178, 0.0
    %183 = vst [vmem:[#allocation2] sm:$0xff] %v179
    %184 = vst [vmem:[#allocation2 + $0x8] sm:$0xff] %v180
    %185 = vst [vmem:[#allocation2 + $0x10] sm:$0xff] %v181
    %186 = vst [vmem:[#allocation2 + $0x18] sm:$0xff] %v182
    // Predicated region
    $region18: #{tpu_custom_call.1} parent=1 // pred_check
      _
    $region19: #{tpu_custom_call.1} parent=1 // pred_check_branch
      %188 = sbr.rel (0) target = $region21
    $region20: #{tpu_custom_call.1} parent=1 // pred_region
      %s190 = ssub.s32 512, 512
      %191 = vsyncadd [#allocation3], %s190
      %s192 = sshll.u32 [#allocation2], 4
      %s193 = int_to_ptr.vmem [resolvable:$true] %s192
      %198 = dma.vmem_to_hbm [thread:$0]  %s193, 512, %s4, [#allocation3], 128, 128, 8
    $region21: #{tpu_custom_call.1} parent=1 // pred_fallthru
      _
    // Predicated region
    $region22: #{tpu_custom_call.1} parent=1 // pred_check
      _
    $region23: #{tpu_custom_call.1} parent=1 // pred_check_branch
      %200 = sbr.rel (0) target = $region25
    $region24: #{tpu_custom_call.1} parent=1 // pred_region
      %201 = dma.done [#allocation3], 512
    $region25: #{tpu_custom_call.1} parent=1 // pred_fallthru
      _
    %202 = vsyncpa [#allocation3], 1

</llo_original>
